<compile_context>
chip_gen: v7x
topology: tpu7x:2x2x1
jax: 0.10.0
libtpu: 0.0.40
codegen_flags: <defaults>
</compile_context>

<pallas_src>
import jax
import jax.numpy as jnp
from jax.experimental import pallas as pl
from jax.experimental.pallas import tpu as pltpu


def _discriminator_kernel(b_ref, wc_ref, hpl_ref, hmi_ref, out_ref):
    # b_ref:   SMEM (1,)  scalar bias
    # wc_ref:  (1, n_h)   f32, lane-major, VMEM-resident (constant index_map)
    # hpl_ref / hmi_ref: (tn, n_h) streamed row tiles (native dtype)
    # out_ref: (2, tn)    lane-dense f32 output block (row 0 = sc1, row 1 = sc2)
    wc = wc_ref[...]                       # (1, n_h) f32
    b = b_ref[0]
    # VPU broadcast-multiply + XLU lane reduction (f32 accumulate).
    s1 = jnp.sum(hpl_ref[...].astype(jnp.float32) * wc, axis=-1) + b   # (tn,)
    s2 = jnp.sum(hmi_ref[...].astype(jnp.float32) * wc, axis=-1) + b   # (tn,)
    out_ref[0, :] = s1
    out_ref[1, :] = s2


def _cdiv(a, b):
    return -(-a // b)


def _round_down(x, m):
    return (x // m) * m


def _round_up(x, m):
    return _cdiv(x, m) * m


def _vmem_capacity_bytes():
    try:
        return int(pltpu.get_tpu_info().vmem_capacity_bytes)
    except Exception:
        return 64 * 1024 * 1024            # conservative (v7x-sized) fallback


def discriminator_forward(c, h_pl, h_mi, weight, bias,
                          s_bias1=None, s_bias2=None, *, tile_rows=None):
    """Pallas implementation of Discriminator.forward.

    c:      (n_h,)
    h_pl:   (N, n_h)   streamed in its native dtype (f32 or bf16)
    h_mi:   (N, n_h)
    weight: (1, n_h, n_h)  (nn.Bilinear weight, out_features=1)
    bias:   (1,)
    returns logits: (2N,) float32
    """
    n, n_h = h_pl.shape

    # Hoist Wc = W @ c out of the streaming loop (tiny (n_h, n_h) matvec in XLA).
    w2d = weight.reshape(n_h, n_h).astype(jnp.float32)
    wc = (w2d @ c.astype(jnp.float32)).reshape(1, n_h)       # (1, n_h) f32, lane-major
    b = bias.reshape(1).astype(jnp.float32)

    # ---- per-generation tile sizing ----------------------------------------
    itemsize = jnp.dtype(h_pl.dtype).itemsize
    bytes_per_row = max(n_h * itemsize, 1)
    vmem_cap = _vmem_capacity_bytes()
    # ~8 MiB/tile on 128-MiB-VMEM chips, ~4 MiB/tile on 64-MiB chips.
    tile_budget = min(8 * 1024 * 1024, max(vmem_cap // 16, 1 * 1024 * 1024))

    tn = max(128, _round_down(tile_budget // bytes_per_row, 128))
    if tile_rows is not None:
        tn = min(tn, max(128, _round_down(int(tile_rows), 128)))
    # Keep >= 8 grid steps on large inputs so megacore sharding (v7x) and
    # double-buffer overlap both stay effective.
    min_steps = 8
    if n >= min_steps * 128:
        tn = min(tn, _round_up(_cdiv(n, min_steps), 128))
    if n <= tn:
        tn = n                              # single full block (always legal)

    num_tiles = _cdiv(n, tn)
    padded_n = num_tiles * tn
    grid = (num_tiles,)

    # Explicit scoped-VMEM limit: 2 inputs x 2 pipeline buffers of tn*n_h,
    # plus small Wc / output / slack. Capped to 3/4 of physical VMEM.
    tile_bytes = tn * bytes_per_row
    pipeline_bytes = 4 * tile_bytes + 4 * (2 * tn * 4) \
        + 2 * (8 * _round_up(n_h, 128) * 4) + (2 << 20)
    vmem_limit_bytes = int(min(vmem_cap * 3 // 4,
                               max(48 * 1024 * 1024, 2 * pipeline_bytes)))

    out = pl.pallas_call(
        _discriminator_kernel,
        out_shape=jax.ShapeDtypeStruct((2, padded_n), jnp.float32),
        grid=grid,
        in_specs=[
            pl.BlockSpec(memory_space=pltpu.SMEM),         # bias scalar (1,)
            pl.BlockSpec((1, n_h), lambda i: (0, 0)),      # Wc, VMEM-resident
            pl.BlockSpec((tn, n_h), lambda i: (i, 0)),     # h_pl row tile
            pl.BlockSpec((tn, n_h), lambda i: (i, 0)),     # h_mi row tile
        ],
        out_specs=pl.BlockSpec((2, tn), lambda i: (0, i)), # lane-dense slab
        compiler_params=pltpu.CompilerParams(
            dimension_semantics=("parallel",),
            vmem_limit_bytes=vmem_limit_bytes),
    )(b, wc, h_pl, h_mi)

    sc1 = out[0, :n]
    sc2 = out[1, :n]
    if s_bias1 is not None:
        sc1 = sc1 + s_bias1
    if s_bias2 is not None:
        sc2 = sc2 + s_bias2
    return jnp.concatenate([sc1, sc2], axis=0)


def _reference(c, h_pl, h_mi, weight, bias):
    n_h = c.shape[0]
    w2d = weight.reshape(n_h, n_h).astype(jnp.float32)
    wc = w2d @ c.astype(jnp.float32)
    sc1 = h_pl.astype(jnp.float32) @ wc + bias[0]
    sc2 = h_mi.astype(jnp.float32) @ wc + bias[0]
    return jnp.concatenate([sc1, sc2], axis=0)


if __name__ == "__main__":
    key = jax.random.PRNGKey(0)
    k_c, k_pl, k_mi, k_w = jax.random.split(key, 4)

    # --- small shapes consistent with the module ---
    N, n_h = 8, 32
    c = jax.random.normal(k_c, (n_h,), dtype=jnp.float32)
    h_pl = jax.random.normal(k_pl, (N, n_h), dtype=jnp.float32)
    h_mi = jax.random.normal(k_mi, (N, n_h), dtype=jnp.float32)

    # Xavier-uniform-like init for Bilinear weight (1, n_h, n_h); bias = 0.
    fan_in, fan_out = n_h * n_h, n_h
    bound = (6.0 / (fan_in + fan_out)) ** 0.5
    weight = jax.random.uniform(k_w, (1, n_h, n_h), dtype=jnp.float32,
                                minval=-bound, maxval=bound)
    bias = jnp.zeros((1,), dtype=jnp.float32)

    logits = discriminator_forward(c, h_pl, h_mi, weight, bias)
    logits = jax.block_until_ready(logits)
    ref = _reference(c, h_pl, h_mi, weight, bias)
    assert logits.shape == (2 * N,)
    assert jnp.allclose(logits, ref, atol=1e-5, rtol=1e-5)

    # --- second check: larger N (non-multiple of the tile) exercises the
    #     multi-tile, lane-dense-output grid path with a padded last block ---
    N2, n_h2 = 1100, 128
    k_c2, k_pl2, k_mi2, k_w2 = jax.random.split(jax.random.PRNGKey(1), 4)
    c2 = jax.random.normal(k_c2, (n_h2,), dtype=jnp.float32)
    h_pl2 = jax.random.normal(k_pl2, (N2, n_h2), dtype=jnp.float32)
    h_mi2 = jax.random.normal(k_mi2, (N2, n_h2), dtype=jnp.float32)
    bound2 = (6.0 / (n_h2 * n_h2 + n_h2)) ** 0.5
    weight2 = jax.random.uniform(k_w2, (1, n_h2, n_h2), dtype=jnp.float32,
                                 minval=-bound2, maxval=bound2)
    bias2 = jnp.zeros((1,), dtype=jnp.float32)

    logits2 = discriminator_forward(c2, h_pl2, h_mi2, weight2, bias2)
    logits2 = jax.block_until_ready(logits2)
    ref2 = _reference(c2, h_pl2, h_mi2, weight2, bias2)
    assert logits2.shape == (2 * N2,)
    assert jnp.allclose(logits2, ref2, atol=1e-4, rtol=1e-4)

    print("KERNEL_OK")
</pallas_src>

<mosaic_0001>
module attributes {stable_mosaic.version = 11 : i64} {
  func.func @_discriminator_kernel(%arg0: i32, %arg1: memref<1xf32, #tpu.memory_space<smem>>, %arg2: memref<1x32xf32, #tpu.memory_space<vmem>>, %arg3: memref<8x32xf32, #tpu.memory_space<vmem>>, %arg4: memref<8x32xf32, #tpu.memory_space<vmem>>, %arg5: memref<2x8xf32, #tpu.memory_space<vmem>>) attributes {dimension_semantics = [#tpu.dimension_semantics<parallel>], iteration_bounds = array<i64: 1>, scalar_prefetch = 0 : i64, scratch_operands = 0 : i64, tpu.core_type = #tpu.core_type<tc>, window_params = [{transform_indices = @transform_0, window_bounds = array<i64: 1>}, {pipeline_mode = #tpu.pipeline_mode<synchronous>, transform_indices = @transform_1, window_bounds = array<i64: 1, 32>}, {transform_indices = @transform_2, window_bounds = array<i64: 8, 32>}, {transform_indices = @transform_3, window_bounds = array<i64: 8, 32>}, {transform_indices = @transform_4, window_bounds = array<i64: 2, 8>}]} {
    %c0 = arith.constant 0 : index
    %c0_0 = arith.constant 0 : index
    %0 = vector.load %arg2[%c0, %c0_0] : memref<1x32xf32, #tpu.memory_space<vmem>>, vector<1x32xf32>
    %c0_1 = arith.constant 0 : index
    %1 = memref.load %arg1[%c0_1] : memref<1xf32, #tpu.memory_space<smem>>
    %c0_2 = arith.constant 0 : index
    %c0_3 = arith.constant 0 : index
    %2 = vector.load %arg3[%c0_2, %c0_3] : memref<8x32xf32, #tpu.memory_space<vmem>>, vector<8x32xf32>
    %3 = vector.broadcast %0 : vector<1x32xf32> to vector<8x32xf32>
    %4 = arith.mulf %2, %3 : vector<8x32xf32>
    %cst = arith.constant dense<0.000000e+00> : vector<8xf32>
    %5 = vector.multi_reduction <add>, %4, %cst [1] : vector<8x32xf32> to vector<8xf32>
    %6 = vector.broadcast %1 : f32 to vector<8xf32>
    %7 = arith.addf %5, %6 : vector<8xf32>
    %c0_4 = arith.constant 0 : index
    %c0_5 = arith.constant 0 : index
    %8 = vector.load %arg4[%c0_4, %c0_5] : memref<8x32xf32, #tpu.memory_space<vmem>>, vector<8x32xf32>
    %9 = vector.broadcast %0 : vector<1x32xf32> to vector<8x32xf32>
    %10 = arith.mulf %8, %9 : vector<8x32xf32>
    %cst_6 = arith.constant dense<0.000000e+00> : vector<8xf32>
    %11 = vector.multi_reduction <add>, %10, %cst_6 [1] : vector<8x32xf32> to vector<8xf32>
    %12 = vector.broadcast %1 : f32 to vector<8xf32>
    %13 = arith.addf %11, %12 : vector<8xf32>
    %c0_7 = arith.constant 0 : index
    %c0_8 = arith.constant 0 : index
    %14 = vector.load %arg5[%c0_7, %c0_8] : memref<2x8xf32, #tpu.memory_space<vmem>>, vector<1x8xf32>
    %15 = vector.shape_cast %14 : vector<1x8xf32> to vector<8xf32>
    %16 = vector.shape_cast %7 : vector<8xf32> to vector<1x8xf32>
    tpu.vector_store %arg5[%c0_7, %c0_8], %16 {strides = array<i32>} : memref<2x8xf32, #tpu.memory_space<vmem>>, vector<1x8xf32>,
    %c1 = arith.constant 1 : index
    %c0_9 = arith.constant 0 : index
    %17 = vector.load %arg5[%c1, %c0_9] : memref<2x8xf32, #tpu.memory_space<vmem>>, vector<1x8xf32>
    %18 = vector.shape_cast %17 : vector<1x8xf32> to vector<8xf32>
    %19 = vector.shape_cast %13 : vector<8xf32> to vector<1x8xf32>
    tpu.vector_store %arg5[%c1, %c0_9], %19 {strides = array<i32>} : memref<2x8xf32, #tpu.memory_space<vmem>>, vector<1x8xf32>,
    return
  }
  func.func @transform_0(%arg0: i32) -> i32 {
    %c0_i32 = arith.constant 0 : i32
    %c0_i32_0 = arith.constant 0 : i32
    return %c0_i32 : i32
  }
  func.func @transform_1(%arg0: i32) -> (i32, i32) {
    %c0_i32 = arith.constant 0 : i32
    %c0_i32_0 = arith.constant 0 : i32
    %c0_i32_1 = arith.constant 0 : i32
    return %c0_i32, %c0_i32_0 : i32, i32
  }
  func.func @transform_2(%arg0: i32) -> (i32, i32) {
    %c0_i32 = arith.constant 0 : i32
    %c0_i32_0 = arith.constant 0 : i32
    return %arg0, %c0_i32 : i32, i32
  }
  func.func @transform_3(%arg0: i32) -> (i32, i32) {
    %c0_i32 = arith.constant 0 : i32
    %c0_i32_0 = arith.constant 0 : i32
    return %arg0, %c0_i32 : i32, i32
  }
  func.func @transform_4(%arg0: i32) -> (i32, i32) {
    %c0_i32 = arith.constant 0 : i32
    %c0_i32_0 = arith.constant 0 : i32
    return %c0_i32, %arg0 : i32, i32
  }
}

</mosaic_0001>

<llo_original>
// kernel: tpu_custom_call.1
$region0: #{tpu_custom_call.1}
  #allocation0 [shape = 'u32[]', space=smem, size = 0x4, offset = 0x4, fixed_abs, tag = 'smem constant byte address 0x4 - core index']
  #allocation1 [shape = 'u32[144,128]{1,0:T(1,128)}', space=vmem, size = 0x12000, scoped, tag = 'internal scratch']
  #allocation2 [shape = 'f32[1]{0:T(128)S(6)}', space=smem, size = 0x200, scoped, tag = 'scoped memory for tpu_custom_call.1']
  %s0 = inlined_call_operand.<no memory space> [shape: f32[1], index: 0, kind: input, shape index: {}]
  %s1 = inlined_call_operand.vmem [shape: f32[1,32], index: 1, kind: input, shape index: {}]
  %s2 = inlined_call_operand.hbm [shape: f32[8,32], index: 2, kind: input, shape index: {}]
  %s3 = inlined_call_operand.vmem [shape: f32[8,32], index: 3, kind: input, shape index: {}]
  %s4 = inlined_call_operand.hbm [shape: f32[2,8], index: 4, kind: output, shape index: {}]
  %s5 = sld [smem:[#allocation0]]
  $region30: #{tpu_custom_call.1} parent=0
    _
  %s7 = ssub.s32 1, %s5
  %s8 = scalar_select 0, %s7, %s5
  %9 = sst [smem:[#allocation2]] %s0
  $region1: #{tpu_custom_call.1} parent=0
    #allocation3 [shape = 'u8[4096]{0}', space=vmem, size = 0x1000, scoped, tag = 'input window, operand 2, single buffered']
    #allocation4 [shape = 's32[1]{0}', space=sflag, size = 0x4, scoped, tag = 'scoped memory for tpu_custom_call.1']
    #allocation5 [shape = 's32[1]{0}', space=sflag, size = 0x4, scoped, tag = 'scoped memory for tpu_custom_call.1']
    #allocation6 [shape = 'u8[1024]{0}', space=vmem, size = 0x400, scoped, tag = 'output window, operand 0, single buffered']
    %10 = vsyncpa [#allocation4], 0
    %11 = vsyncpa [#allocation5], 0
    // Predicated region
    $region2: #{tpu_custom_call.1} parent=1 // pred_check
      _
    $region3: #{tpu_custom_call.1} parent=1 // pred_check_branch
      %13 = sbr.rel (0) target = $region5
    $region4: #{tpu_custom_call.1} parent=1 // pred_region
      _
    $region5: #{tpu_custom_call.1} parent=1 // pred_fallthru
      _
    // Predicated region
    $region6: #{tpu_custom_call.1} parent=1 // pred_check
      _
    $region7: #{tpu_custom_call.1} parent=1 // pred_check_branch
      %15 = sbr.rel (0) target = $region9
    $region8: #{tpu_custom_call.1} parent=1 // pred_region
      _
    $region9: #{tpu_custom_call.1} parent=1 // pred_fallthru
      _
    // Predicated region
    $region10: #{tpu_custom_call.1} parent=1 // pred_check
      _
    $region11: #{tpu_custom_call.1} parent=1 // pred_check_branch
      %17 = sbr.rel (0) target = $region13
    $region12: #{tpu_custom_call.1} parent=1 // pred_region
      %s19 = ssub.s32 128, 128
      %20 = vsyncadd [#allocation4], %s19
      %s22 = sshll.u32 [#allocation3], 4
      %s23 = int_to_ptr.vmem [resolvable:$true] %s22
      %25 = dma.hbm_to_vmem [thread:$0]  %s2, 128, %s23, [#allocation4]
    $region13: #{tpu_custom_call.1} parent=1 // pred_fallthru
      _
    // Predicated region
    $region14: #{tpu_custom_call.1} parent=1 // pred_check
      _
    $region15: #{tpu_custom_call.1} parent=1 // pred_check_branch
      %27 = sbr.rel (0) target = $region17
    $region16: #{tpu_custom_call.1} parent=1 // pred_region
      _
    $region17: #{tpu_custom_call.1} parent=1 // pred_fallthru
      _
    // Predicated region
    $region18: #{tpu_custom_call.1} parent=1 // pred_check
      _
    $region19: #{tpu_custom_call.1} parent=1 // pred_check_branch
      %29 = sbr.rel (0) target = $region21
    $region20: #{tpu_custom_call.1} parent=1 // pred_region
      %30 = dma.done [#allocation4], 128
    $region21: #{tpu_custom_call.1} parent=1 // pred_fallthru
      _
    %v31 = vld [vmem:[%s1] sm:$0x1]
    %s32 = sld [smem:[#allocation2]]
    %v33 = vld [vmem:[#allocation3] sm:$0xff]
    %v35 = vlaneseq
    %v36 = vshrl.u32 %v35, 7
    %v37 = vsub.s32 0, %v36
    %v38 = vrot.slane %v31, %v37
    %v40 = vmul.f32 %v33, %v38
    %vm41 = vcmask 261120
    %v42 = vsel %vm41, %v40, 0.0
    %43 = vadd.xlane.f32.xlu0 %v42
    %v44 = vpop.xlane.xlu0 %43
    %v45 = vstv %s32
    %v46 = vadd.f32 %v44, %v45
    %v47 = vld [vmem:[%s3] sm:$0xff]
    %v48 = vmul.f32 %v47, %v38
    %v49 = vsel %vm41, %v48, 0.0
    %50 = vadd.xlane.f32.xlu0 %v49
    %v51 = vpop.xlane.xlu0 %50
    %v52 = vadd.f32 %v51, %v45
    %v54 = vlaneseq
    %v55 = vand.u32 %v54, 127
    %v56 = vlaneseq
    %v57 = vshrl.u32 %v56, 7
    %v58 = vsub.s32 %v55, %v57
    %v59 = vrot.slane %v46, %v58
    %vm61 = vcmask 57344
    %62 = vst.msk [vmem:[#allocation6] sm:$0x1] %vm61, %v59
    %v64 = vlaneseq
    %v65 = vshrl.u32 %v64, 7
    %v66 = vsub.s32 %v55, %v65
    %v67 = vrot.slane %v52, %v66
    %69 = vst.msk [vmem:[#allocation6 + $0x1] sm:$0x1] %vm61, %v67
    // Predicated region
    $region22: #{tpu_custom_call.1} parent=1 // pred_check
      _
    $region23: #{tpu_custom_call.1} parent=1 // pred_check_branch
      %71 = sbr.rel (0) target = $region25
    $region24: #{tpu_custom_call.1} parent=1 // pred_region
      %s73 = ssub.s32 32, 32
      %74 = vsyncadd [#allocation5], %s73
      %s76 = sshll.u32 [#allocation6], 4
      %s77 = int_to_ptr.vmem [resolvable:$true] %s76
      %79 = dma.vmem_to_hbm [thread:$0]  %s77, 32, %s4, [#allocation5]
    $region25: #{tpu_custom_call.1} parent=1 // pred_fallthru
      _
    // Predicated region
    $region26: #{tpu_custom_call.1} parent=1 // pred_check
      _
    $region27: #{tpu_custom_call.1} parent=1 // pred_check_branch
      %81 = sbr.rel (0) target = $region29
    $region28: #{tpu_custom_call.1} parent=1 // pred_region
      %82 = dma.done [#allocation5], 32
    $region29: #{tpu_custom_call.1} parent=1 // pred_fallthru
      _
    %83 = vsyncpa [#allocation4], 1
    %84 = vsyncpa [#allocation5], 1

</llo_original>
